<compile_context>
chip_gen: v7x
topology: tpu7x:2x2x1
jax: 0.10.0
libtpu: 0.0.40
codegen_flags: <defaults>
</compile_context>

<pallas_src>
import math
from functools import partial

import jax
import jax.numpy as jnp
from jax.experimental import pallas as pl
from jax.experimental.pallas import tpu as pltpu


# ---------------------------------------------------------------- tiling helpers

def _round_up(x, m):
    return ((x + m - 1) // m) * m


def _pick_tile(dim, pref, align):
    """Return (tile, padded_dim): full (aligned) dim if small, else `pref`."""
    padded = _round_up(dim, align)
    if padded <= pref:
        return padded, padded
    return pref, _round_up(dim, pref)


def _pick_kn_tiles(K, N):
    TK, Kp = _pick_tile(K, 1024, 128)
    TN, Np = _pick_tile(N, 512, 128)
    # v7x megacore: keep >= 2 tiles along the (parallel) N axis when out_dim allows,
    # so the second TensorCore has work even when the batch axis has a single tile.
    if Np // TN == 1 and Np >= 256:
        TN = _round_up(Np // 2, 128)
        Np = 2 * TN
    return TK, Kp, TN, Np


def _pad2(a, rows, cols):
    return jnp.pad(a, ((0, rows - a.shape[0]), (0, cols - a.shape[1])))


def _vmem_limit_bytes(TM, TK, TN, Kp, Np):
    # Double-buffered bf16 input tiles + double-buffered f32 output tile
    # + f32 accumulator scratch + the small resident-ish vectors.
    need = (2 * TM * TK * 2            # x tiles (bf16)
            + 2 * 2 * TK * TN * 2      # Wmu^T + Wsig^T tiles (bf16)
            + 2 * TM * TN * 4          # output tiles (f32)
            + TM * TN * 4              # accumulator scratch (f32)
            + 2 * 4 * (TK + 2 * TN))   # eps_in / eps_out / bias vectors (f32)
    try:
        phys = int(getattr(pltpu.get_tpu_info(), "vmem_capacity_bytes", 64 * 2**20))
    except Exception:
        phys = 64 * 2**20              # v7x per-TensorCore VMEM (smallest generation)
    cap = (phys * 3) // 4              # never request the entire physical VMEM
    return int(min(max(int(need * 1.25), 16 * 2**20), cap))


# ---------------------------------------------------------------- kernel

def _noisy_linear_kernel(x_ref, wmu_ref, wsig_ref, ein_ref, eout_ref, b_ref,
                         o_ref, acc_ref):
    """One (TM, TN) output tile, accumulated over the K grid axis (innermost)."""
    k = pl.program_id(2)

    @pl.when(k == 0)
    def _():
        acc_ref[...] = jnp.zeros_like(acc_ref)

    x = x_ref[...]                                             # (TM, TK) bf16
    # mean path: x @ Wmu^T  (weights pre-transposed to (K, N) in prepare)
    part = jnp.dot(x, wmu_ref[...], preferred_element_type=jnp.float32)
    # factorized-noise path: eps is rank-1 (eps_out ⊗ eps_in), so
    #   x @ (sigma * eps).T == ((x * eps_in) @ sigma.T) * eps_out
    # Multiply in f32 (v5e VPU has no bf16), cast to bf16 only for the MXU.
    xs = (x.astype(jnp.float32) * ein_ref[...]).astype(jnp.bfloat16)
    part += jnp.dot(xs, wsig_ref[...],
                    preferred_element_type=jnp.float32) * eout_ref[...]
    acc_ref[...] += part

    @pl.when(k == pl.num_programs(2) - 1)
    def _():
        # b_ref already holds the effective bias  bias_mu + bias_sigma * eps_out.
        o_ref[...] = (acc_ref[...] + b_ref[...]).astype(o_ref.dtype)


# ---------------------------------------------------------------- host-side wrappers

def prepare_noisy_linear(weight_mu, weight_sigma, bias_mu, bias_sigma,
                         eps_in, eps_out):
    """One-time layout prep (per parameter update / per reset_noise).

    The heavy part (transpose + pad + bf16 cast of both weight matrices) depends only
    on the parameters; the noise-dependent pieces are O(in_dim + out_dim).
    """
    N, K = weight_mu.shape
    TK, Kp, TN, Np = _pick_kn_tiles(K, N)

    wmu_t = _pad2(jnp.asarray(weight_mu, jnp.float32).T, Kp, Np).astype(jnp.bfloat16)
    wsig_t = _pad2(jnp.asarray(weight_sigma, jnp.float32).T, Kp, Np).astype(jnp.bfloat16)

    ein = _pad2(jnp.asarray(eps_in, jnp.float32).reshape(1, K), 1, Kp)
    eout = _pad2(jnp.asarray(eps_out, jnp.float32).reshape(1, N), 1, Np)
    beff = jnp.asarray(bias_mu, jnp.float32) \
        + jnp.asarray(bias_sigma, jnp.float32) * jnp.asarray(eps_out, jnp.float32)
    beff = _pad2(beff.reshape(1, N), 1, Np)

    return dict(wmu_t=wmu_t, wsig_t=wsig_t, ein=ein, eout=eout, beff=beff,
                in_dim=K, out_dim=N, TK=TK, TN=TN)


@partial(jax.jit, static_argnames=("out_dim", "tk", "tn"))
def _noisy_linear_impl(x, wmu_t, wsig_t, ein, eout, beff, *, out_dim, tk, tn):
    M, K = x.shape
    Kp, Np = wmu_t.shape

    TM, Mp = _pick_tile(M, 128, 16)            # 16: bf16 sublane packing
    x_p = _pad2(x.astype(jnp.float32), Mp, Kp).astype(jnp.bfloat16)

    grid = (Mp // TM, Np // tn, Kp // tk)
    vmem_limit = _vmem_limit_bytes(TM, tk, tn, Kp, Np)

    out = pl.pallas_call(
        _noisy_linear_kernel,
        out_shape=jax.ShapeDtypeStruct((Mp, Np), jnp.float32),
        grid_spec=pltpu.PrefetchScalarGridSpec(
            num_scalar_prefetch=0,
            grid=grid,
            in_specs=[
                pl.BlockSpec((TM, tk), lambda i, j, k: (i, k)),   # x        (bf16)
                pl.BlockSpec((tk, tn), lambda i, j, k: (k, j)),   # Wmu^T    (bf16)
                pl.BlockSpec((tk, tn), lambda i, j, k: (k, j)),   # Wsig^T   (bf16)
                pl.BlockSpec((1, tk), lambda i, j, k: (0, k)),    # eps_in   (f32)
                pl.BlockSpec((1, tn), lambda i, j, k: (0, j)),    # eps_out  (f32)
                pl.BlockSpec((1, tn), lambda i, j, k: (0, j)),    # eff bias (f32)
            ],
            out_specs=pl.BlockSpec((TM, tn), lambda i, j, k: (i, j)),
            scratch_shapes=[pltpu.VMEM((TM, tn), jnp.float32)],
        ),
        compiler_params=pltpu.CompilerParams(
            dimension_semantics=("parallel", "parallel", "arbitrary"),
            vmem_limit_bytes=vmem_limit,
        ),
    )(x_p, wmu_t, wsig_t, ein, eout, beff)

    return out[:M, :out_dim]


def noisy_linear(x, params):
    """Factorized NoisyNet linear: x (batch, in_dim) f32 -> (batch, out_dim) f32."""
    x = jnp.asarray(x, jnp.float32)
    assert x.shape[1] == params["in_dim"]
    return _noisy_linear_impl(
        x, params["wmu_t"], params["wsig_t"], params["ein"], params["eout"],
        params["beff"], out_dim=params["out_dim"], tk=params["TK"], tn=params["TN"])


# ------------------- deterministic parameter construction (mirrors __init__/reset_noise)

def scale_noise(key, size):
    # torch: x ~ N(0,1); return sign(x) * sqrt(|x|)
    x = jax.random.normal(key, (size,), dtype=jnp.float32)
    return jnp.sign(x) * jnp.sqrt(jnp.abs(x))


def make_noisy_linear_params(key, in_dim, out_dim, std_init=0.5):
    k_wmu, k_bmu, k_ein, k_eout = jax.random.split(key, 4)
    mu_range = 1.0 / math.sqrt(in_dim)

    weight_mu = jax.random.uniform(k_wmu, (out_dim, in_dim),
                                   minval=-mu_range, maxval=mu_range,
                                   dtype=jnp.float32)
    weight_sigma = jnp.full((out_dim, in_dim),
                            std_init / math.sqrt(in_dim), dtype=jnp.float32)
    bias_mu = jax.random.uniform(k_bmu, (out_dim,),
                                 minval=-mu_range, maxval=mu_range,
                                 dtype=jnp.float32)
    bias_sigma = jnp.full((out_dim,),
                          std_init / math.sqrt(out_dim), dtype=jnp.float32)

    eps_in = scale_noise(k_ein, in_dim)       # factorized noise factors
    eps_out = scale_noise(k_eout, out_dim)    # (bias_epsilon == eps_out)

    return (weight_mu, weight_sigma, bias_mu, bias_sigma, eps_in, eps_out)


if __name__ == "__main__":
    in_dim, out_dim, batch = 32, 64, 8

    key = jax.random.PRNGKey(0)
    k_params, k_x = jax.random.split(key)
    (weight_mu, weight_sigma, bias_mu, bias_sigma,
     eps_in, eps_out) = make_noisy_linear_params(k_params, in_dim, out_dim, std_init=0.5)
    x = jax.random.normal(k_x, (batch, in_dim), dtype=jnp.float32)

    params = prepare_noisy_linear(weight_mu, weight_sigma, bias_mu, bias_sigma,
                                  eps_in, eps_out)
    y = noisy_linear(x, params)
    y = jax.block_until_ready(y)

    # Reference 1: original torch-style fp32 math (materialized weight_epsilon).
    weight_epsilon = jnp.outer(eps_out, eps_in)     # eps_out.ger(eps_in)
    y_ref_f32 = x @ (weight_mu + weight_sigma * weight_epsilon).T \
        + (bias_mu + bias_sigma * eps_out)

    # Reference 2: same bf16 dtype handling as the kernel (tight check).
    x_bf = x.astype(jnp.bfloat16)
    xs_bf = (x_bf.astype(jnp.float32) * eps_in[None, :]).astype(jnp.bfloat16)
    y_ref_bf = (jnp.dot(x_bf, weight_mu.astype(jnp.bfloat16).T,
                        preferred_element_type=jnp.float32)
                + jnp.dot(xs_bf, weight_sigma.astype(jnp.bfloat16).T,
                          preferred_element_type=jnp.float32) * eps_out[None, :]
                + (bias_mu + bias_sigma * eps_out)[None, :])

    assert y.shape == (batch, out_dim)
    assert jnp.allclose(y, y_ref_f32, atol=5e-2, rtol=5e-2), "f32 reference mismatch"
    assert jnp.allclose(y, y_ref_bf, atol=2e-3, rtol=2e-3), "bf16-matched reference mismatch"

    print("KERNEL_OK")
</pallas_src>

<mosaic_0001>
module attributes {stable_mosaic.version = 11 : i64} {
  func.func @_noisy_linear_kernel(%arg0: i32, %arg1: i32, %arg2: i32, %arg3: memref<16x128xbf16, #tpu.memory_space<vmem>>, %arg4: memref<128x128xbf16, #tpu.memory_space<vmem>>, %arg5: memref<128x128xbf16, #tpu.memory_space<vmem>>, %arg6: memref<1x128xf32, #tpu.memory_space<vmem>>, %arg7: memref<1x128xf32, #tpu.memory_space<vmem>>, %arg8: memref<1x128xf32, #tpu.memory_space<vmem>>, %arg9: memref<16x128xf32, #tpu.memory_space<vmem>>, %arg10: memref<16x128xf32, #tpu.memory_space<vmem>>) attributes {dimension_semantics = [#tpu.dimension_semantics<parallel>, #tpu.dimension_semantics<parallel>, #tpu.dimension_semantics<arbitrary>], iteration_bounds = array<i64: 1, 1, 1>, scalar_prefetch = 0 : i64, scratch_operands = 1 : i64, tpu.core_type = #tpu.core_type<tc>, window_params = [{transform_indices = @transform_0, window_bounds = array<i64: 16, 128>}, {transform_indices = @transform_1, window_bounds = array<i64: 128, 128>}, {transform_indices = @transform_2, window_bounds = array<i64: 128, 128>}, {transform_indices = @transform_3, window_bounds = array<i64: 1, 128>}, {transform_indices = @transform_4, window_bounds = array<i64: 1, 128>}, {transform_indices = @transform_5, window_bounds = array<i64: 1, 128>}, {transform_indices = @transform_6, window_bounds = array<i64: 16, 128>}]} {
    %c0_i32 = arith.constant 0 : i32
    %0 = arith.cmpi eq, %arg2, %c0_i32 : i32
    %1 = arith.extui %0 : i1 to i32
    %c0_i32_0 = arith.constant 0 : i32
    %2 = arith.cmpi ne, %1, %c0_i32_0 : i32
    scf.if %2 {
      %cst_17 = arith.constant 0.000000e+00 : f32
      %23 = vector.broadcast %cst_17 : f32 to vector<16x128xf32>
      %c0_18 = arith.constant 0 : index
      %c0_19 = arith.constant 0 : index
      %24 = vector.load %arg10[%c0_18, %c0_19] : memref<16x128xf32, #tpu.memory_space<vmem>>, vector<16x128xf32>
      tpu.vector_store %arg10[%c0_18, %c0_19], %23 {strides = array<i32>} : memref<16x128xf32, #tpu.memory_space<vmem>>, vector<16x128xf32>,
    } else {
    }
    %c0 = arith.constant 0 : index
    %c0_1 = arith.constant 0 : index
    %3 = vector.load %arg3[%c0, %c0_1] : memref<16x128xbf16, #tpu.memory_space<vmem>>, vector<16x128xbf16>
    %c0_2 = arith.constant 0 : index
    %c0_3 = arith.constant 0 : index
    %4 = vector.load %arg4[%c0_2, %c0_3] : memref<128x128xbf16, #tpu.memory_space<vmem>>, vector<128x128xbf16>
    %cst = arith.constant dense<0.000000e+00> : vector<16x128xf32>
    %5 = tpu.matmul %3, %4, %cst {dimension_numbers = #tpu.dot_dimension_numbers<[1], [0], [0], [1], [0, 0, 1, 1], [], []>} : vector<16x128xbf16>, vector<128x128xbf16>, vector<16x128xf32> -> vector<16x128xf32>
    %6 = arith.extf %3 : vector<16x128xbf16> to vector<16x128xf32>
    %c0_4 = arith.constant 0 : index
    %c0_5 = arith.constant 0 : index
    %7 = vector.load %arg6[%c0_4, %c0_5] : memref<1x128xf32, #tpu.memory_space<vmem>>, vector<1x128xf32>
    %8 = vector.broadcast %7 : vector<1x128xf32> to vector<16x128xf32>
    %9 = arith.mulf %6, %8 : vector<16x128xf32>
    %10 = arith.truncf %9 : vector<16x128xf32> to vector<16x128xbf16>
    %c0_6 = arith.constant 0 : index
    %c0_7 = arith.constant 0 : index
    %11 = vector.load %arg5[%c0_6, %c0_7] : memref<128x128xbf16, #tpu.memory_space<vmem>>, vector<128x128xbf16>
    %cst_8 = arith.constant dense<0.000000e+00> : vector<16x128xf32>
    %12 = tpu.matmul %10, %11, %cst_8 {dimension_numbers = #tpu.dot_dimension_numbers<[1], [0], [0], [1], [0, 0, 1, 1], [], []>} : vector<16x128xbf16>, vector<128x128xbf16>, vector<16x128xf32> -> vector<16x128xf32>
    %c0_9 = arith.constant 0 : index
    %c0_10 = arith.constant 0 : index
    %13 = vector.load %arg7[%c0_9, %c0_10] : memref<1x128xf32, #tpu.memory_space<vmem>>, vector<1x128xf32>
    %14 = vector.broadcast %13 : vector<1x128xf32> to vector<16x128xf32>
    %15 = arith.mulf %12, %14 : vector<16x128xf32>
    %16 = arith.addf %5, %15 : vector<16x128xf32>
    %c0_11 = arith.constant 0 : index
    %c0_12 = arith.constant 0 : index
    %17 = vector.load %arg10[%c0_11, %c0_12] : memref<16x128xf32, #tpu.memory_space<vmem>>, vector<16x128xf32>
    %18 = arith.addf %17, %16 : vector<16x128xf32>
    %c0_13 = arith.constant 0 : index
    %c0_14 = arith.constant 0 : index
    %19 = vector.load %arg10[%c0_13, %c0_14] : memref<16x128xf32, #tpu.memory_space<vmem>>, vector<16x128xf32>
    tpu.vector_store %arg10[%c0_13, %c0_14], %18 {strides = array<i32>} : memref<16x128xf32, #tpu.memory_space<vmem>>, vector<16x128xf32>,
    %c0_i32_15 = arith.constant 0 : i32
    %20 = arith.cmpi eq, %arg2, %c0_i32_15 : i32
    %21 = arith.extui %20 : i1 to i32
    %c0_i32_16 = arith.constant 0 : i32
    %22 = arith.cmpi ne, %21, %c0_i32_16 : i32
    scf.if %22 {
      %c0_17 = arith.constant 0 : index
      %c0_18 = arith.constant 0 : index
      %23 = vector.load %arg10[%c0_17, %c0_18] : memref<16x128xf32, #tpu.memory_space<vmem>>, vector<16x128xf32>
      %c0_19 = arith.constant 0 : index
      %c0_20 = arith.constant 0 : index
      %24 = vector.load %arg8[%c0_19, %c0_20] : memref<1x128xf32, #tpu.memory_space<vmem>>, vector<1x128xf32>
      %25 = vector.broadcast %24 : vector<1x128xf32> to vector<16x128xf32>
      %26 = arith.addf %23, %25 : vector<16x128xf32>
      %c0_21 = arith.constant 0 : index
      %c0_22 = arith.constant 0 : index
      %27 = vector.load %arg9[%c0_21, %c0_22] : memref<16x128xf32, #tpu.memory_space<vmem>>, vector<16x128xf32>
      tpu.vector_store %arg9[%c0_21, %c0_22], %26 {strides = array<i32>} : memref<16x128xf32, #tpu.memory_space<vmem>>, vector<16x128xf32>,
    } else {
    }
    return
  }
  func.func @transform_0(%arg0: i32, %arg1: i32, %arg2: i32) -> (i32, i32) {
    %c0_i32 = arith.constant 0 : i32
    return %arg0, %arg2 : i32, i32
  }
  func.func @transform_1(%arg0: i32, %arg1: i32, %arg2: i32) -> (i32, i32) {
    %c0_i32 = arith.constant 0 : i32
    return %arg2, %arg1 : i32, i32
  }
  func.func @transform_2(%arg0: i32, %arg1: i32, %arg2: i32) -> (i32, i32) {
    %c0_i32 = arith.constant 0 : i32
    return %arg2, %arg1 : i32, i32
  }
  func.func @transform_3(%arg0: i32, %arg1: i32, %arg2: i32) -> (i32, i32) {
    %c0_i32 = arith.constant 0 : i32
    %c0_i32_0 = arith.constant 0 : i32
    return %c0_i32, %arg2 : i32, i32
  }
  func.func @transform_4(%arg0: i32, %arg1: i32, %arg2: i32) -> (i32, i32) {
    %c0_i32 = arith.constant 0 : i32
    %c0_i32_0 = arith.constant 0 : i32
    return %c0_i32, %arg1 : i32, i32
  }
  func.func @transform_5(%arg0: i32, %arg1: i32, %arg2: i32) -> (i32, i32) {
    %c0_i32 = arith.constant 0 : i32
    %c0_i32_0 = arith.constant 0 : i32
    return %c0_i32, %arg1 : i32, i32
  }
  func.func @transform_6(%arg0: i32, %arg1: i32, %arg2: i32) -> (i32, i32) {
    %c0_i32 = arith.constant 0 : i32
    return %arg0, %arg1 : i32, i32
  }
}

</mosaic_0001>

<llo_original>
// kernel: _noisy_linear_impl.1
$region0: #{_noisy_linear_impl.1}
  #allocation0 [shape = 'u32[]', space=smem, size = 0x4, offset = 0x4, fixed_abs, tag = 'smem constant byte address 0x4 - core index']
  #allocation1 [shape = 'u32[144,128]{1,0:T(1,128)}', space=vmem, size = 0x12000, scoped, tag = 'internal scratch']
  #allocation2 [shape = 'f32[16,128]{1,0:T(8,128)}', space=vmem, size = 0x2000, scoped, tag = 'scratch operand']
  %s0 = inlined_call_operand.vmem [shape: bf16[16,128], index: 0, kind: input, shape index: {}]
  %s1 = inlined_call_operand.hbm [shape: bf16[128,128], index: 1, kind: input, shape index: {}]
  %s2 = inlined_call_operand.hbm [shape: bf16[128,128], index: 2, kind: input, shape index: {}]
  %s3 = inlined_call_operand.vmem [shape: f32[1,128], index: 3, kind: input, shape index: {}]
  %s4 = inlined_call_operand.vmem [shape: f32[1,128], index: 4, kind: input, shape index: {}]
  %s5 = inlined_call_operand.vmem [shape: f32[1,128], index: 5, kind: input, shape index: {}]
  %s6 = inlined_call_operand.vmem [shape: f32[16,128], index: 6, kind: output, shape index: {}]
  %s7 = sld [smem:[#allocation0]]
  $region50: #{_noisy_linear_impl.1} parent=0
    _
  %s9 = ssub.s32 1, %s7
  %s10 = scalar_select 0, %s9, %s7
  $region1: #{_noisy_linear_impl.1} parent=0
    #allocation3 [shape = 'u8[32768]{0}', space=vmem, size = 0x8000, scoped, tag = 'input window, operand 1, single buffered']
    #allocation4 [shape = 's32[1]{0}', space=sflag, size = 0x4, scoped, tag = 'scoped memory for _noisy_linear_impl.1']
    #allocation5 [shape = 'u8[32768]{0}', space=vmem, size = 0x8000, scoped, tag = 'input window, operand 2, single buffered']
    #allocation6 [shape = 's32[1]{0}', space=sflag, size = 0x4, scoped, tag = 'scoped memory for _noisy_linear_impl.1']
    %11 = vsyncpa [#allocation4], 0
    %12 = vsyncpa [#allocation6], 0
    // Predicated region
    $region2: #{_noisy_linear_impl.1} parent=1 // pred_check
      _
    $region3: #{_noisy_linear_impl.1} parent=1 // pred_check_branch
      %14 = sbr.rel (0) target = $region5
    $region4: #{_noisy_linear_impl.1} parent=1 // pred_region
      _
    $region5: #{_noisy_linear_impl.1} parent=1 // pred_fallthru
      _
    // Predicated region
    $region6: #{_noisy_linear_impl.1} parent=1 // pred_check
      _
    $region7: #{_noisy_linear_impl.1} parent=1 // pred_check_branch
      %16 = sbr.rel (0) target = $region9
    $region8: #{_noisy_linear_impl.1} parent=1 // pred_region
      %s18 = ssub.s32 1024, 1024
      %19 = vsyncadd [#allocation4], %s18
      %s20 = sshll.u32 [#allocation3], 4
      %s21 = int_to_ptr.vmem [resolvable:$true] %s20
      %26 = dma.hbm_to_vmem [thread:$0]  %s1, 1024, %s21, [#allocation4], 64, 64, 4
    $region9: #{_noisy_linear_impl.1} parent=1 // pred_fallthru
      _
    // Predicated region
    $region10: #{_noisy_linear_impl.1} parent=1 // pred_check
      _
    $region11: #{_noisy_linear_impl.1} parent=1 // pred_check_branch
      %28 = sbr.rel (0) target = $region13
    $region12: #{_noisy_linear_impl.1} parent=1 // pred_region
      %s30 = ssub.s32 1024, 1024
      %31 = vsyncadd [#allocation6], %s30
      %s32 = sshll.u32 [#allocation5], 4
      %s33 = int_to_ptr.vmem [resolvable:$true] %s32
      %38 = dma.hbm_to_vmem [thread:$0]  %s2, 1024, %s33, [#allocation6], 64, 64, 4
    $region13: #{_noisy_linear_impl.1} parent=1 // pred_fallthru
      _
    // Predicated region
    $region14: #{_noisy_linear_impl.1} parent=1 // pred_check
      _
    $region15: #{_noisy_linear_impl.1} parent=1 // pred_check_branch
      %40 = sbr.rel (0) target = $region17
    $region16: #{_noisy_linear_impl.1} parent=1 // pred_region
      _
    $region17: #{_noisy_linear_impl.1} parent=1 // pred_fallthru
      _
    // Predicated region
    $region18: #{_noisy_linear_impl.1} parent=1 // pred_check
      _
    $region19: #{_noisy_linear_impl.1} parent=1 // pred_check_branch
      %42 = sbr.rel (0) target = $region21
    $region20: #{_noisy_linear_impl.1} parent=1 // pred_region
      _
    $region21: #{_noisy_linear_impl.1} parent=1 // pred_fallthru
      _
    // Predicated region
    $region22: #{_noisy_linear_impl.1} parent=1 // pred_check
      _
    $region23: #{_noisy_linear_impl.1} parent=1 // pred_check_branch
      %44 = sbr.rel (0) target = $region25
    $region24: #{_noisy_linear_impl.1} parent=1 // pred_region
      _
    $region25: #{_noisy_linear_impl.1} parent=1 // pred_fallthru
      _
    // Predicated region
    $region26: #{_noisy_linear_impl.1} parent=1 // pred_check
      _
    $region27: #{_noisy_linear_impl.1} parent=1 // pred_check_branch
      %46 = sbr.rel (0) target = $region29
    $region28: #{_noisy_linear_impl.1} parent=1 // pred_region
      %47 = dma.done [#allocation4], 1024
    $region29: #{_noisy_linear_impl.1} parent=1 // pred_fallthru
      _
    // Predicated region
    $region30: #{_noisy_linear_impl.1} parent=1 // pred_check
      _
    $region31: #{_noisy_linear_impl.1} parent=1 // pred_check_branch
      %49 = sbr.rel (0) target = $region33
    $region32: #{_noisy_linear_impl.1} parent=1 // pred_region
      %50 = dma.done [#allocation6], 1024
    $region33: #{_noisy_linear_impl.1} parent=1 // pred_fallthru
      _
    %p52 = scmp.eq.s32.totalorder 0, 0
    // Predicated region
    $region34: #{_noisy_linear_impl.1} parent=1 // pred_check
      %p53 = pneg %p52
    $region35: #{_noisy_linear_impl.1} parent=1 // pred_check_branch
      %55 = sbr.rel (%p53) target = $region37
    $region36: #{_noisy_linear_impl.1} parent=1 // pred_region
      %56 = vst [vmem:[#allocation2] sm:$0xff] 0.0
      %57 = vst [vmem:[#allocation2 + $0x8] sm:$0xff] 0.0
    $region37: #{_noisy_linear_impl.1} parent=1 // pred_fallthru
      _
    %v58 = vld [vmem:[%s0] sm:$0xf]
    %v59 = vld [vmem:[%s0 + $0x4] sm:$0xf]
    %v60 = vld [vmem:[#allocation3] sm:$0xf]
    %v61 = vld [vmem:[#allocation3 + $0x4] sm:$0xf]
    %v62 = vld [vmem:[#allocation3 + $0x8] sm:$0xf]
    %v63 = vld [vmem:[#allocation3 + $0xc] sm:$0xf]
    %v64 = vld [vmem:[#allocation3 + $0x10] sm:$0xf]
    %v65 = vld [vmem:[#allocation3 + $0x14] sm:$0xf]
    %v66 = vld [vmem:[#allocation3 + $0x18] sm:$0xf]
    %v67 = vld [vmem:[#allocation3 + $0x1c] sm:$0xf]
    %v68 = vld [vmem:[#allocation3 + $0x20] sm:$0xf]
    %v69 = vld [vmem:[#allocation3 + $0x24] sm:$0xf]
    %v70 = vld [vmem:[#allocation3 + $0x28] sm:$0xf]
    %v71 = vld [vmem:[#allocation3 + $0x2c] sm:$0xf]
    %v72 = vld [vmem:[#allocation3 + $0x30] sm:$0xf]
    %v73 = vld [vmem:[#allocation3 + $0x34] sm:$0xf]
    %v74 = vld [vmem:[#allocation3 + $0x38] sm:$0xf]
    %v75 = vld [vmem:[#allocation3 + $0x3c] sm:$0xf]
    %v76 = vunpack.c.l.bf16 %v58
    %v77 = vunpack.c.l.bf16 %v59
    %v78 = vld [vmem:[%s3] sm:$0x1]
    %v80 = vlaneseq
    %v81 = vshrl.u32 %v80, 7
    %v82 = vsub.s32 0, %v81
    %v83 = vrot.slane %v78, %v82
    %v85 = vmul.f32 %v76, %v83
    %v86 = vmul.f32 %v77, %v83
    %v87 = vpack.c.bf16 %v86, %v85
    %v88 = vld [vmem:[#allocation5] sm:$0xf]
    %v89 = vld [vmem:[#allocation5 + $0x4] sm:$0xf]
    %v90 = vld [vmem:[#allocation5 + $0x8] sm:$0xf]
    %v91 = vld [vmem:[#allocation5 + $0xc] sm:$0xf]
    %v92 = vld [vmem:[#allocation5 + $0x10] sm:$0xf]
    %v93 = vld [vmem:[#allocation5 + $0x14] sm:$0xf]
    %v94 = vld [vmem:[#allocation5 + $0x18] sm:$0xf]
    %v95 = vld [vmem:[#allocation5 + $0x1c] sm:$0xf]
    %v96 = vld [vmem:[#allocation5 + $0x20] sm:$0xf]
    %v97 = vld [vmem:[#allocation5 + $0x24] sm:$0xf]
    %v98 = vld [vmem:[#allocation5 + $0x28] sm:$0xf]
    %v99 = vld [vmem:[#allocation5 + $0x2c] sm:$0xf]
    %v100 = vld [vmem:[#allocation5 + $0x30] sm:$0xf]
    %v101 = vld [vmem:[#allocation5 + $0x34] sm:$0xf]
    %v102 = vld [vmem:[#allocation5 + $0x38] sm:$0xf]
    %v103 = vld [vmem:[#allocation5 + $0x3c] sm:$0xf]
    %v120 = vunpack.c.l.b16 %v88
    %v121 = vunpack.c.l.b16 %v89
    %v122 = vunpack.c.l.b16 %v90
    %v123 = vunpack.c.l.b16 %v91
    %v124 = vunpack.c.l.b16 %v92
    %v125 = vunpack.c.l.b16 %v93
    %v126 = vunpack.c.l.b16 %v94
    %v127 = vunpack.c.l.b16 %v95
    %v128 = vunpack.c.l.b16 %v96
    %v129 = vunpack.c.l.b16 %v97
    %v130 = vunpack.c.l.b16 %v98
    %v131 = vunpack.c.l.b16 %v99
    %v132 = vunpack.c.l.b16 %v100
    %v133 = vunpack.c.l.b16 %v101
    %v134 = vunpack.c.l.b16 %v102
    %v135 = vunpack.c.l.b16 %v103
    %v136 = vpack.c.b16 %v121, %v120
    %v137 = vpack.c.b16 %v123, %v122
    %v138 = vpack.c.b16 %v125, %v124
    %v139 = vpack.c.b16 %v127, %v126
    %v140 = vpack.c.b16 %v129, %v128
    %v141 = vpack.c.b16 %v131, %v130
    %v142 = vpack.c.b16 %v133, %v132
    %v143 = vpack.c.b16 %v135, %v134
    %152 = vmatprep.subr.bf16.mxu0 0
    %153 = vmatpush1.bf16.msra.mxu0 %v136
    %154 = vmatprep.subr.bf16.mxu0 0
    %155 = vmatpush1.bf16.msra.mxu0 %v137
    %156 = vmatprep.subr.bf16.mxu0 0
    %157 = vmatpush1.bf16.msra.mxu0 %v138
    %158 = vmatprep.subr.bf16.mxu0 0
    %159 = vmatpush1.bf16.msra.mxu0 %v139
    %160 = vmatprep.subr.bf16.mxu0 0
    %161 = vmatpush1.bf16.msra.mxu0 %v140
    %162 = vmatprep.subr.bf16.mxu0 0
    %163 = vmatpush1.bf16.msra.mxu0 %v141
    %164 = vmatprep.subr.bf16.mxu0 0
    %165 = vmatpush1.bf16.msra.mxu0 %v142
    %166 = vmatprep.subr.bf16.mxu0 0
    %167 = vmatpush1.bf16.msra.mxu0 %v143
    %168 = vmatprep.subr.bf16.mxu0 0
    %169 = vmatpush1.bf16.msra.mxu0 0
    %170 = vmatprep.subr.bf16.mxu0 0
    %171 = vmatpush1.bf16.msra.mxu0 0
    %172 = vmatprep.subr.bf16.mxu0 0
    %173 = vmatpush1.bf16.msra.mxu0 0
    %174 = vmatprep.subr.bf16.mxu0 0
    %175 = vmatpush1.bf16.msra.mxu0 0
    %176 = vmatprep.subr.bf16.mxu0 0
    %177 = vmatpush1.bf16.msra.mxu0 0
    %178 = vmatprep.subr.bf16.mxu0 0
    %179 = vmatpush1.bf16.msra.mxu0 0
    %180 = vmatprep.subr.bf16.mxu0 0
    %181 = vmatpush1.bf16.msra.mxu0 0
    %182 = vmatprep.subr.bf16.mxu0 0
    %183 = vmatpush1.bf16.msra.mxu0 0
    %184 = vmatprep.mubr.bf16.mxu0 0
    %185 = vmatmul.mubr.bf16.gmra.mrb[0].mxu0 %v87
    %v186 = vpop.f32.mrb[0].mxu0
    %v187 = vadd.f32 0.0, %v186
    %v188 = vpop.f32.mrb[0].mxu0
    %v189 = vpop.f32.mrb[0].mxu0
    %v190 = vadd.f32 0.0, %v189
    %v191 = vpop.f32.mrb[0].mxu0
    %192 = vdwg.mxu0
    %v193 = vld [vmem:[%s4] sm:$0x1]
    %v195 = vlaneseq
    %v196 = vshrl.u32 %v195, 7
    %v197 = vsub.s32 0, %v196
    %v198 = vrot.slane %v193, %v197
    %v200 = vmul.f32 %v187, %v198
    %v201 = vmul.f32 %v190, %v198
    %v204 = vunpack.c.l.b16 %v58
    %v205 = vunpack.c.l.b16 %v59
    %v206 = vpack.c.b16 %v205, %v204
    %v224 = vunpack.c.l.b16 %v60
    %v225 = vunpack.c.l.b16 %v61
    %v226 = vunpack.c.l.b16 %v62
    %v227 = vunpack.c.l.b16 %v63
    %v228 = vunpack.c.l.b16 %v64
    %v229 = vunpack.c.l.b16 %v65
    %v230 = vunpack.c.l.b16 %v66
    %v231 = vunpack.c.l.b16 %v67
    %v232 = vunpack.c.l.b16 %v68
    %v233 = vunpack.c.l.b16 %v69
    %v234 = vunpack.c.l.b16 %v70
    %v235 = vunpack.c.l.b16 %v71
    %v236 = vunpack.c.l.b16 %v72
    %v237 = vunpack.c.l.b16 %v73
    %v238 = vunpack.c.l.b16 %v74
    %v239 = vunpack.c.l.b16 %v75
    %v240 = vpack.c.b16 %v225, %v224
    %v241 = vpack.c.b16 %v227, %v226
    %v242 = vpack.c.b16 %v229, %v228
    %v243 = vpack.c.b16 %v231, %v230
    %v244 = vpack.c.b16 %v233, %v232
    %v245 = vpack.c.b16 %v235, %v234
    %v246 = vpack.c.b16 %v237, %v236
    %v247 = vpack.c.b16 %v239, %v238
    %256 = vmatprep.subr.bf16.mxu0 0
    %257 = vmatpush1.bf16.msra.mxu0 %v240
    %258 = vmatprep.subr.bf16.mxu0 0
    %259 = vmatpush1.bf16.msra.mxu0 %v241
    %260 = vmatprep.subr.bf16.mxu0 0
    %261 = vmatpush1.bf16.msra.mxu0 %v242
    %262 = vmatprep.subr.bf16.mxu0 0
    %263 = vmatpush1.bf16.msra.mxu0 %v243
    %264 = vmatprep.subr.bf16.mxu0 0
    %265 = vmatpush1.bf16.msra.mxu0 %v244
    %266 = vmatprep.subr.bf16.mxu0 0
    %267 = vmatpush1.bf16.msra.mxu0 %v245
    %268 = vmatprep.subr.bf16.mxu0 0
    %269 = vmatpush1.bf16.msra.mxu0 %v246
    %270 = vmatprep.subr.bf16.mxu0 0
    %271 = vmatpush1.bf16.msra.mxu0 %v247
    %272 = vmatprep.subr.bf16.mxu0 0
    %273 = vmatpush1.bf16.msra.mxu0 0
    %274 = vmatprep.subr.bf16.mxu0 0
    %275 = vmatpush1.bf16.msra.mxu0 0
    %276 = vmatprep.subr.bf16.mxu0 0
    %277 = vmatpush1.bf16.msra.mxu0 0
    %278 = vmatprep.subr.bf16.mxu0 0
    %279 = vmatpush1.bf16.msra.mxu0 0
    %280 = vmatprep.subr.bf16.mxu0 0
    %281 = vmatpush1.bf16.msra.mxu0 0
    %282 = vmatprep.subr.bf16.mxu0 0
    %283 = vmatpush1.bf16.msra.mxu0 0
    %284 = vmatprep.subr.bf16.mxu0 0
    %285 = vmatpush1.bf16.msra.mxu0 0
    %286 = vmatprep.subr.bf16.mxu0 0
    %287 = vmatpush1.bf16.msra.mxu0 0
    %288 = vmatprep.mubr.bf16.mxu0 0
    %289 = vmatmul.mubr.bf16.gmra.mrb[0].mxu0 %v206
    %v290 = vpop.f32.mrb[0].mxu0
    %v291 = vadd.f32 %v200, %v290
    %v292 = vpop.f32.mrb[0].mxu0
    %v293 = vpop.f32.mrb[0].mxu0
    %v294 = vadd.f32 %v201, %v293
    %v295 = vpop.f32.mrb[0].mxu0
    %296 = vdwg.mxu0
    %v297 = vld [vmem:[#allocation2] sm:$0xff]
    %v298 = vld [vmem:[#allocation2 + $0x8] sm:$0xff]
    %v299 = vadd.f32 %v297, %v291
    %v300 = vadd.f32 %v298, %v294
    %301 = vst [vmem:[#allocation2] sm:$0xff] %v299
    %302 = vst [vmem:[#allocation2 + $0x8] sm:$0xff] %v300
    // Predicated region
    $region38: #{_noisy_linear_impl.1} parent=1 // pred_check
      %p303 = pneg %p52
    $region39: #{_noisy_linear_impl.1} parent=1 // pred_check_branch
      %305 = sbr.rel (%p303) target = $region41
    $region40: #{_noisy_linear_impl.1} parent=1 // pred_region
      %v306 = vld [vmem:[#allocation2] sm:$0xff]
      %v307 = vld [vmem:[#allocation2 + $0x8] sm:$0xff]
      %v308 = vld [vmem:[%s5] sm:$0x1]
      %v310 = vlaneseq
      %v311 = vshrl.u32 %v310, 7
      %v312 = vsub.s32 0, %v311
      %v313 = vrot.slane %v308, %v312
      %v315 = vadd.f32 %v306, %v313
      %v316 = vadd.f32 %v307, %v313
      %317 = vst [vmem:[%s6] sm:$0xff] %v315
      %318 = vst [vmem:[%s6 + $0x8] sm:$0xff] %v316
    $region41: #{_noisy_linear_impl.1} parent=1 // pred_fallthru
      _
    // Predicated region
    $region42: #{_noisy_linear_impl.1} parent=1 // pred_check
      _
    $region43: #{_noisy_linear_impl.1} parent=1 // pred_check_branch
      %320 = sbr.rel (0) target = $region45
    $region44: #{_noisy_linear_impl.1} parent=1 // pred_region
      _
    $region45: #{_noisy_linear_impl.1} parent=1 // pred_fallthru
      _
    // Predicated region
    $region46: #{_noisy_linear_impl.1} parent=1 // pred_check
      _
    $region47: #{_noisy_linear_impl.1} parent=1 // pred_check_branch
      %322 = sbr.rel (0) target = $region49
    $region48: #{_noisy_linear_impl.1} parent=1 // pred_region
      _
    $region49: #{_noisy_linear_impl.1} parent=1 // pred_fallthru
      _
    %323 = vsyncpa [#allocation4], 1
    %324 = vsyncpa [#allocation6], 1

</llo_original>
